<compile_context>
chip_gen: v5e
topology: v5e:2x2
jax: 0.10.0
libtpu: 0.0.40
codegen_flags: <defaults>
</compile_context>

<pallas_src>
import jax
import jax.numpy as jnp
import numpy as np
from jax import lax
from jax.experimental import pallas as pl
from jax.experimental.pallas import tpu as pltpu


def _round_up(x, m):
    return (x + m - 1) // m * m


def _pick_tk(K, max_tk=1024):
    """K-reduction tile: whole K if small, else a 128-multiple divisor."""
    if K <= max_tk:
        return K
    for tk in (1024, 512, 256, 128):
        if K % tk == 0:
            return tk
    return K


def _vmem_limit(nbytes):
    # double-buffered tiles + headroom; stay well under v7x's 64 MiB physical VMEM
    return int(min(max(nbytes + (8 << 20), 32 << 20), 56 << 20))


# ---------------------------------------------------------------------------
# Kernel 1: conv-as-matmul (bf16 patches @ bf16 weights, f32 accumulation),
#           K-tiled, emitting per-M-tile partial BatchNorm statistics.
#   grid = (M_tiles [parallel], K_tiles [arbitrary])
#   stats block layout: row 0 = per-channel sum, row 1 = per-channel sum-of-squares.
# ---------------------------------------------------------------------------
def conv_matmul_kernel(p_ref, w_ref, y_ref, stats_ref, acc_ref):
    k = pl.program_id(1)

    @pl.when(k == 0)
    def _():
        acc_ref[...] = jnp.zeros_like(acc_ref)

    acc_ref[...] += jnp.dot(p_ref[...], w_ref[...],
                            preferred_element_type=jnp.float32)

    @pl.when(k == pl.num_programs(1) - 1)
    def _():
        y = acc_ref[...]
        y_ref[...] = y
        stats_ref[...] = jnp.zeros_like(stats_ref)
        stats_ref[0:1, :] = jnp.sum(y, axis=0, keepdims=True)
        stats_ref[1:2, :] = jnp.sum(y * y, axis=0, keepdims=True)


# ---------------------------------------------------------------------------
# Kernel 2: y * scale + shift, then ReLU (lane-dense tiles, output aliases y).
# ---------------------------------------------------------------------------
def bn_relu_kernel(y_ref, scale_ref, shift_ref, o_ref):
    o_ref[...] = jnp.maximum(y_ref[...] * scale_ref[...] + shift_ref[...], 0.0)


# ---------------------------------------------------------------------------
# Host-side glue
# ---------------------------------------------------------------------------
def _im2col_k4s2p1(x, compute_dtype):
    """x: (N, C, H, W) -> patches (N*Ho*Wo, C*16) in compute_dtype.

    K ordering is (c, kh, kw) to match torch's conv weight flattening. Built in NHWC so
    the expanded patch tensor needs no large transpose afterwards.
    """
    N, C, H, W = x.shape
    Ho, Wo = H // 2, W // 2
    xh = jnp.transpose(x, (0, 2, 3, 1)).astype(compute_dtype)        # (N, H, W, C)
    xp = jnp.pad(xh, ((0, 0), (1, 1), (1, 1), (0, 0)))
    cols = []
    for kh in range(4):
        for kw in range(4):
            cols.append(lax.slice(
                xp,
                (0, kh, kw, 0),
                (N, kh + 2 * (Ho - 1) + 1, kw + 2 * (Wo - 1) + 1, C),
                (1, 2, 2, 1)))                                        # (N, Ho, Wo, C)
    pat = jnp.stack(cols, axis=-1)                                    # (N, Ho, Wo, C, 16)
    return pat.reshape(N * Ho * Wo, C * 16), (N, Ho, Wo)


def unet_down(x, conv_w, conv_b, bn_gamma, bn_beta, *, eps=1e-5,
              tm=512, compute_dtype=jnp.bfloat16):
    """x: (N, in_c, H, W); conv_w: (out_c, in_c, 4, 4); returns (N, out_c, H/2, W/2)."""
    # A per-channel conv bias applied before train-mode BatchNorm is exactly cancelled by
    # the batch-mean subtraction, so it is dropped from the kernels.
    del conv_b

    N, in_c, H, W = x.shape
    out_c = conv_w.shape[0]

    patches, (_, Ho, Wo) = _im2col_k4s2p1(x, compute_dtype)
    M, K = patches.shape

    # ---- tiling ----------------------------------------------------------------
    Cp = _round_up(out_c, 128)                 # lane-dense output channels
    if M <= tm:
        tm = _round_up(M, 8)                   # handle small / ragged M without a tail tile
    M_pad = _round_up(M, tm)
    tk = _pick_tk(K)
    n_m, n_k = M_pad // tm, K // tk

    # ---- pad operands (zero rows/cols contribute nothing to matmul or stats) ----
    if M_pad != M:
        patches = jnp.pad(patches, ((0, M_pad - M), (0, 0)))
    w2d = jnp.pad(conv_w.reshape(out_c, in_c * 16).T.astype(compute_dtype),
                  ((0, 0), (0, Cp - out_c)))                          # (K, Cp)

    itemsize = jnp.dtype(compute_dtype).itemsize
    conv_bytes = (2 * tm * tk * itemsize + 2 * tk * Cp * itemsize     # double-buffered inputs
                  + 2 * tm * Cp * 4 + 2 * 8 * Cp * 4                  # double-buffered outputs
                  + tm * Cp * 4)                                      # accumulator scratch

    y, stats = pl.pallas_call(
        conv_matmul_kernel,
        out_shape=(
            jax.ShapeDtypeStruct((M_pad, Cp), jnp.float32),
            jax.ShapeDtypeStruct((n_m * 8, Cp), jnp.float32),
        ),
        grid_spec=pltpu.PrefetchScalarGridSpec(
            num_scalar_prefetch=0,
            grid=(n_m, n_k),
            in_specs=[
                pl.BlockSpec((tm, tk), lambda i, k: (i, k)),
                pl.BlockSpec((tk, Cp), lambda i, k: (k, 0)),
            ],
            out_specs=(
                pl.BlockSpec((tm, Cp), lambda i, k: (i, 0)),
                pl.BlockSpec((8, Cp), lambda i, k: (i, 0)),
            ),
            scratch_shapes=[pltpu.VMEM((tm, Cp), jnp.float32)],
        ),
        compiler_params=pltpu.CompilerParams(
            dimension_semantics=("parallel", "arbitrary"),
            vmem_limit_bytes=_vmem_limit(conv_bytes)),
    )(patches, w2d)

    # ---- BatchNorm2d (training mode: biased batch stats over N*Ho*Wo) -----------
    stats = stats.reshape(n_m, 8, Cp)
    s = jnp.sum(stats[:, 0, :], axis=0)                               # (Cp,)
    ssq = jnp.sum(stats[:, 1, :], axis=0)                             # (Cp,)
    mean = s / M                                                      # padded rows contribute 0
    var = jnp.maximum(ssq / M - mean * mean, 0.0)                     # guard tiny negative
    inv_std = lax.rsqrt(var + eps)
    gamma = jnp.pad(bn_gamma.astype(jnp.float32), (0, Cp - out_c))
    beta = jnp.pad(bn_beta.astype(jnp.float32), (0, Cp - out_c))
    scale = (gamma * inv_std).reshape(1, Cp)
    shift = (beta - mean * gamma * inv_std).reshape(1, Cp)

    bn_bytes = 2 * 2 * tm * Cp * 4 + 2 * 2 * Cp * 4
    out = pl.pallas_call(
        bn_relu_kernel,
        out_shape=jax.ShapeDtypeStruct((M_pad, Cp), jnp.float32),
        grid_spec=pltpu.PrefetchScalarGridSpec(
            num_scalar_prefetch=0,
            grid=(n_m,),
            in_specs=[
                pl.BlockSpec((tm, Cp), lambda i: (i, 0)),
                pl.BlockSpec((1, Cp), lambda i: (0, 0)),
                pl.BlockSpec((1, Cp), lambda i: (0, 0)),
            ],
            out_specs=pl.BlockSpec((tm, Cp), lambda i: (i, 0)),
        ),
        input_output_aliases={0: 0},                                  # reuse y's HBM buffer
        compiler_params=pltpu.CompilerParams(
            dimension_semantics=("parallel",),
            vmem_limit_bytes=_vmem_limit(bn_bytes)),
    )(y, scale, shift)

    # (M_pad, Cp) -> drop padding -> (N, Ho, Wo, out_c) -> NCHW
    out = out[:M, :out_c].reshape(N, Ho, Wo, out_c)
    return jnp.transpose(out, (0, 3, 1, 2))


# ---------------------------------------------------------------------------
# Pure-JAX reference (inputs quantized to the same bf16 the MXU consumes)
# ---------------------------------------------------------------------------
def unet_down_ref(x, conv_w, conv_b, bn_gamma, bn_beta, eps=1e-5,
                  compute_dtype=jnp.bfloat16):
    xq = x.astype(compute_dtype).astype(jnp.float32)
    wq = conv_w.astype(compute_dtype).astype(jnp.float32)
    y = lax.conv_general_dilated(
        xq, wq, window_strides=(2, 2), padding=((1, 1), (1, 1)),
        dimension_numbers=("NCHW", "OIHW", "NCHW"))
    y = y + conv_b.reshape(1, -1, 1, 1).astype(jnp.float32)
    mean = jnp.mean(y, axis=(0, 2, 3), keepdims=True)
    var = jnp.mean((y - mean) ** 2, axis=(0, 2, 3), keepdims=True)
    y = (y - mean) / jnp.sqrt(var + eps)
    y = y * bn_gamma.reshape(1, -1, 1, 1) + bn_beta.reshape(1, -1, 1, 1)
    return jnp.maximum(y, 0.0)


if __name__ == "__main__":
    key = jax.random.PRNGKey(0)
    k_x, k_w, k_b, k_g, k_bt = jax.random.split(key, 5)

    N, in_c, H, W = 2, 4, 16, 16
    out_c = 8

    x = jax.random.normal(k_x, (N, in_c, H, W), dtype=jnp.float32)
    fan_in = in_c * 4 * 4
    conv_w = jax.random.normal(k_w, (out_c, in_c, 4, 4), dtype=jnp.float32) / jnp.sqrt(fan_in)
    conv_b = 0.1 * jax.random.normal(k_b, (out_c,), dtype=jnp.float32)
    bn_gamma = 1.0 + 0.1 * jax.random.normal(k_g, (out_c,), dtype=jnp.float32)
    bn_beta = 0.1 * jax.random.normal(k_bt, (out_c,), dtype=jnp.float32)

    fwd = jax.jit(unet_down)
    out = jax.block_until_ready(fwd(x, conv_w, conv_b, bn_gamma, bn_beta))

    ref = jax.block_until_ready(unet_down_ref(x, conv_w, conv_b, bn_gamma, bn_beta))
    assert out.shape == (N, out_c, H // 2, W // 2)
    np.testing.assert_allclose(np.asarray(out), np.asarray(ref), atol=5e-3, rtol=5e-3)

    print("KERNEL_OK")
</pallas_src>

<mosaic_0001>
module attributes {stable_mosaic.version = 11 : i64} {
  func.func @conv_matmul_kernel(%arg0: i32, %arg1: i32, %arg2: memref<128x64xbf16, #tpu.memory_space<vmem>>, %arg3: memref<64x128xbf16, #tpu.memory_space<vmem>>, %arg4: memref<128x128xf32, #tpu.memory_space<vmem>>, %arg5: memref<8x128xf32, #tpu.memory_space<vmem>>, %arg6: memref<128x128xf32, #tpu.memory_space<vmem>>) attributes {dimension_semantics = [#tpu.dimension_semantics<parallel>, #tpu.dimension_semantics<arbitrary>], iteration_bounds = array<i64: 1, 1>, scalar_prefetch = 0 : i64, scratch_operands = 1 : i64, tpu.core_type = #tpu.core_type<tc>, window_params = [{transform_indices = @transform_0, window_bounds = array<i64: 128, 64>}, {transform_indices = @transform_1, window_bounds = array<i64: 64, 128>}, {transform_indices = @transform_2, window_bounds = array<i64: 128, 128>}, {transform_indices = @transform_3, window_bounds = array<i64: 8, 128>}]} {
    %c0_i32 = arith.constant 0 : i32
    %0 = arith.cmpi eq, %arg1, %c0_i32 : i32
    %1 = arith.extui %0 : i1 to i32
    %c0_i32_0 = arith.constant 0 : i32
    %2 = arith.cmpi ne, %1, %c0_i32_0 : i32
    scf.if %2 {
      %cst_10 = arith.constant 0.000000e+00 : f32
      %12 = vector.broadcast %cst_10 : f32 to vector<128x128xf32>
      %c0_11 = arith.constant 0 : index
      %c0_12 = arith.constant 0 : index
      %13 = vector.load %arg6[%c0_11, %c0_12] : memref<128x128xf32, #tpu.memory_space<vmem>>, vector<128x128xf32>
      tpu.vector_store %arg6[%c0_11, %c0_12], %12 {strides = array<i32>} : memref<128x128xf32, #tpu.memory_space<vmem>>, vector<128x128xf32>,
    } else {
    }
    %c0 = arith.constant 0 : index
    %c0_1 = arith.constant 0 : index
    %3 = vector.load %arg6[%c0, %c0_1] : memref<128x128xf32, #tpu.memory_space<vmem>>, vector<128x128xf32>
    %c0_2 = arith.constant 0 : index
    %c0_3 = arith.constant 0 : index
    %4 = vector.load %arg2[%c0_2, %c0_3] : memref<128x64xbf16, #tpu.memory_space<vmem>>, vector<128x64xbf16>
    %c0_4 = arith.constant 0 : index
    %c0_5 = arith.constant 0 : index
    %5 = vector.load %arg3[%c0_4, %c0_5] : memref<64x128xbf16, #tpu.memory_space<vmem>>, vector<64x128xbf16>
    %cst = arith.constant dense<0.000000e+00> : vector<128x128xf32>
    %6 = tpu.matmul %4, %5, %cst {dimension_numbers = #tpu.dot_dimension_numbers<[1], [0], [0], [1], [0, 0, 1, 1], [], []>} : vector<128x64xbf16>, vector<64x128xbf16>, vector<128x128xf32> -> vector<128x128xf32>
    %7 = arith.addf %3, %6 : vector<128x128xf32>
    %c0_6 = arith.constant 0 : index
    %c0_7 = arith.constant 0 : index
    %8 = vector.load %arg6[%c0_6, %c0_7] : memref<128x128xf32, #tpu.memory_space<vmem>>, vector<128x128xf32>
    tpu.vector_store %arg6[%c0_6, %c0_7], %7 {strides = array<i32>} : memref<128x128xf32, #tpu.memory_space<vmem>>, vector<128x128xf32>,
    %c0_i32_8 = arith.constant 0 : i32
    %9 = arith.cmpi eq, %arg1, %c0_i32_8 : i32
    %10 = arith.extui %9 : i1 to i32
    %c0_i32_9 = arith.constant 0 : i32
    %11 = arith.cmpi ne, %10, %c0_i32_9 : i32
    scf.if %11 {
      %c0_10 = arith.constant 0 : index
      %c0_11 = arith.constant 0 : index
      %12 = vector.load %arg6[%c0_10, %c0_11] : memref<128x128xf32, #tpu.memory_space<vmem>>, vector<128x128xf32>
      %c0_12 = arith.constant 0 : index
      %c0_13 = arith.constant 0 : index
      %13 = vector.load %arg4[%c0_12, %c0_13] : memref<128x128xf32, #tpu.memory_space<vmem>>, vector<128x128xf32>
      tpu.vector_store %arg4[%c0_12, %c0_13], %12 {strides = array<i32>} : memref<128x128xf32, #tpu.memory_space<vmem>>, vector<128x128xf32>,
      %cst_14 = arith.constant 0.000000e+00 : f32
      %14 = vector.broadcast %cst_14 : f32 to vector<8x128xf32>
      %c0_15 = arith.constant 0 : index
      %c0_16 = arith.constant 0 : index
      %15 = vector.load %arg5[%c0_15, %c0_16] : memref<8x128xf32, #tpu.memory_space<vmem>>, vector<8x128xf32>
      tpu.vector_store %arg5[%c0_15, %c0_16], %14 {strides = array<i32>} : memref<8x128xf32, #tpu.memory_space<vmem>>, vector<8x128xf32>,
      %cst_17 = arith.constant dense<0.000000e+00> : vector<128xf32>
      %16 = vector.multi_reduction <add>, %12, %cst_17 [0] : vector<128x128xf32> to vector<128xf32>
      %17 = vector.shape_cast %16 : vector<128xf32> to vector<1x128xf32>
      %c0_18 = arith.constant 0 : index
      %c0_19 = arith.constant 0 : index
      %18 = vector.load %arg5[%c0_18, %c0_19] : memref<8x128xf32, #tpu.memory_space<vmem>>, vector<1x128xf32>
      tpu.vector_store %arg5[%c0_18, %c0_19], %17 {strides = array<i32>} : memref<8x128xf32, #tpu.memory_space<vmem>>, vector<1x128xf32>,
      %19 = arith.mulf %12, %12 : vector<128x128xf32>
      %cst_20 = arith.constant dense<0.000000e+00> : vector<128xf32>
      %20 = vector.multi_reduction <add>, %19, %cst_20 [0] : vector<128x128xf32> to vector<128xf32>
      %21 = vector.shape_cast %20 : vector<128xf32> to vector<1x128xf32>
      %c1 = arith.constant 1 : index
      %c0_21 = arith.constant 0 : index
      %22 = vector.load %arg5[%c1, %c0_21] : memref<8x128xf32, #tpu.memory_space<vmem>>, vector<1x128xf32>
      tpu.vector_store %arg5[%c1, %c0_21], %21 {strides = array<i32>} : memref<8x128xf32, #tpu.memory_space<vmem>>, vector<1x128xf32>,
    } else {
    }
    return
  }
  func.func @transform_0(%arg0: i32, %arg1: i32) -> (i32, i32) {
    %c0_i32 = arith.constant 0 : i32
    return %arg0, %arg1 : i32, i32
  }
  func.func @transform_1(%arg0: i32, %arg1: i32) -> (i32, i32) {
    %c0_i32 = arith.constant 0 : i32
    %c0_i32_0 = arith.constant 0 : i32
    return %arg1, %c0_i32 : i32, i32
  }
  func.func @transform_2(%arg0: i32, %arg1: i32) -> (i32, i32) {
    %c0_i32 = arith.constant 0 : i32
    %c0_i32_0 = arith.constant 0 : i32
    return %arg0, %c0_i32 : i32, i32
  }
  func.func @transform_3(%arg0: i32, %arg1: i32) -> (i32, i32) {
    %c0_i32 = arith.constant 0 : i32
    %c0_i32_0 = arith.constant 0 : i32
    return %arg0, %c0_i32 : i32, i32
  }
}

module attributes {stable_mosaic.version = 11 : i64} {
  func.func @bn_relu_kernel(%arg0: i32, %arg1: memref<128x128xf32, #tpu.memory_space<vmem>>, %arg2: memref<1x128xf32, #tpu.memory_space<vmem>>, %arg3: memref<1x128xf32, #tpu.memory_space<vmem>>, %arg4: memref<128x128xf32, #tpu.memory_space<vmem>>) attributes {dimension_semantics = [#tpu.dimension_semantics<parallel>], iteration_bounds = array<i64: 1>, scalar_prefetch = 0 : i64, scratch_operands = 0 : i64, tpu.core_type = #tpu.core_type<tc>, window_params = [{transform_indices = @transform_0, window_bounds = array<i64: 128, 128>}, {pipeline_mode = #tpu.pipeline_mode<synchronous>, transform_indices = @transform_1, window_bounds = array<i64: 1, 128>}, {pipeline_mode = #tpu.pipeline_mode<synchronous>, transform_indices = @transform_2, window_bounds = array<i64: 1, 128>}, {transform_indices = @transform_3, window_bounds = array<i64: 128, 128>}]} {
    %c0 = arith.constant 0 : index
    %c0_0 = arith.constant 0 : index
    %0 = vector.load %arg1[%c0, %c0_0] : memref<128x128xf32, #tpu.memory_space<vmem>>, vector<128x128xf32>
    %c0_1 = arith.constant 0 : index
    %c0_2 = arith.constant 0 : index
    %1 = vector.load %arg2[%c0_1, %c0_2] : memref<1x128xf32, #tpu.memory_space<vmem>>, vector<1x128xf32>
    %2 = vector.broadcast %1 : vector<1x128xf32> to vector<128x128xf32>
    %3 = arith.mulf %0, %2 : vector<128x128xf32>
    %c0_3 = arith.constant 0 : index
    %c0_4 = arith.constant 0 : index
    %4 = vector.load %arg3[%c0_3, %c0_4] : memref<1x128xf32, #tpu.memory_space<vmem>>, vector<1x128xf32>
    %5 = vector.broadcast %4 : vector<1x128xf32> to vector<128x128xf32>
    %6 = arith.addf %3, %5 : vector<128x128xf32>
    %cst = arith.constant 0.000000e+00 : f32
    %7 = vector.broadcast %cst : f32 to vector<128x128xf32>
    %8 = arith.maximumf %6, %7 : vector<128x128xf32>
    %c0_5 = arith.constant 0 : index
    %c0_6 = arith.constant 0 : index
    %9 = vector.load %arg4[%c0_5, %c0_6] : memref<128x128xf32, #tpu.memory_space<vmem>>, vector<128x128xf32>
    tpu.vector_store %arg4[%c0_5, %c0_6], %8 {strides = array<i32>} : memref<128x128xf32, #tpu.memory_space<vmem>>, vector<128x128xf32>,
    return
  }
  func.func @transform_0(%arg0: i32) -> (i32, i32) {
    %c0_i32 = arith.constant 0 : i32
    %c0_i32_0 = arith.constant 0 : i32
    return %arg0, %c0_i32 : i32, i32
  }
  func.func @transform_1(%arg0: i32) -> (i32, i32) {
    %c0_i32 = arith.constant 0 : i32
    %c0_i32_0 = arith.constant 0 : i32
    %c0_i32_1 = arith.constant 0 : i32
    return %c0_i32, %c0_i32_0 : i32, i32
  }
  func.func @transform_2(%arg0: i32) -> (i32, i32) {
    %c0_i32 = arith.constant 0 : i32
    %c0_i32_0 = arith.constant 0 : i32
    %c0_i32_1 = arith.constant 0 : i32
    return %c0_i32, %c0_i32_0 : i32, i32
  }
  func.func @transform_3(%arg0: i32) -> (i32, i32) {
    %c0_i32 = arith.constant 0 : i32
    %c0_i32_0 = arith.constant 0 : i32
    return %arg0, %c0_i32 : i32, i32
  }
}

</mosaic_0001>

<llo_original>
// kernel: unet_down.3
$region0: #{unet_down.3}
  #allocation0 [shape = 'u32[]', space=smem, size = 0x4, offset = 0x4, fixed_abs, tag = 'smem constant byte address 0x4 - core index']
  #allocation1 [shape = 'u32[72,128]{1,0:T(1,128)}', space=vmem, size = 0x9000, scoped, tag = 'internal scratch']
  %s0 = inlined_call_operand.vmem [shape: f32[128,128], index: 0, kind: input, shape index: {}, may-alias: {0,3}]
  %s1 = inlined_call_operand.vmem [shape: f32[1,128], index: 1, kind: input, shape index: {}]
  %s2 = inlined_call_operand.vmem [shape: f32[1,128], index: 2, kind: input, shape index: {}]
  %s3 = inlined_call_operand.vmem [shape: f32[128,128], index: 3, kind: output, shape index: {}, may-alias: {0,3}]
  %s4 = sld [smem:[#allocation0]]
  $region22: #{unet_down.3} parent=0
    _
  %s6 = ssub.s32 1, %s4
  %s7 = scalar_select 0, %s6, %s4
  // Predicated region
  $region2: #{unet_down.3} parent=0 // pred_check
    _
  $region3: #{unet_down.3} parent=0 // pred_check_branch
    %9 = sbr.rel (0) target = $region5
  $region4: #{unet_down.3} parent=0 // pred_region
    _
  $region5: #{unet_down.3} parent=0 // pred_fallthru
    _
  // Predicated region
  $region6: #{unet_down.3} parent=0 // pred_check
    _
  $region7: #{unet_down.3} parent=0 // pred_check_branch
    %11 = sbr.rel (0) target = $region9
  $region8: #{unet_down.3} parent=0 // pred_region
    _
  $region9: #{unet_down.3} parent=0 // pred_fallthru
    _
  // Predicated region
  $region10: #{unet_down.3} parent=0 // pred_check
    _
  $region11: #{unet_down.3} parent=0 // pred_check_branch
    %13 = sbr.rel (0) target = $region13
  $region12: #{unet_down.3} parent=0 // pred_region
    _
  $region13: #{unet_down.3} parent=0 // pred_fallthru
    _
  %v14 = vld [vmem:[%s0] sm:$0xff]
  %v15 = vld [vmem:[%s0 + $0x8] sm:$0xff]
  %v16 = vld [vmem:[%s0 + $0x10] sm:$0xff]
  %v17 = vld [vmem:[%s0 + $0x18] sm:$0xff]
  %v18 = vld [vmem:[%s0 + $0x20] sm:$0xff]
  %v19 = vld [vmem:[%s0 + $0x28] sm:$0xff]
  %v20 = vld [vmem:[%s0 + $0x30] sm:$0xff]
  %v21 = vld [vmem:[%s0 + $0x38] sm:$0xff]
  %v22 = vld [vmem:[%s0 + $0x40] sm:$0xff]
  %v23 = vld [vmem:[%s0 + $0x48] sm:$0xff]
  %v24 = vld [vmem:[%s0 + $0x50] sm:$0xff]
  %v25 = vld [vmem:[%s0 + $0x58] sm:$0xff]
  %v26 = vld [vmem:[%s0 + $0x60] sm:$0xff]
  %v27 = vld [vmem:[%s0 + $0x68] sm:$0xff]
  %v28 = vld [vmem:[%s0 + $0x70] sm:$0xff]
  %v29 = vld [vmem:[%s0 + $0x78] sm:$0xff]
  %v30 = vld [vmem:[%s1] sm:$0x1]
  %v32 = vperm.slane %v30, 0
  %v34 = vmul.f32 %v14, %v32
  %v35 = vmul.f32 %v15, %v32
  %v36 = vmul.f32 %v16, %v32
  %v37 = vmul.f32 %v17, %v32
  %v38 = vmul.f32 %v18, %v32
  %v39 = vmul.f32 %v19, %v32
  %v40 = vmul.f32 %v20, %v32
  %v41 = vmul.f32 %v21, %v32
  %v42 = vmul.f32 %v22, %v32
  %v43 = vmul.f32 %v23, %v32
  %v44 = vmul.f32 %v24, %v32
  %v45 = vmul.f32 %v25, %v32
  %v46 = vmul.f32 %v26, %v32
  %v47 = vmul.f32 %v27, %v32
  %v48 = vmul.f32 %v28, %v32
  %v49 = vmul.f32 %v29, %v32
  %v50 = vld [vmem:[%s2] sm:$0x1]
  %v52 = vperm.slane %v50, 0
  %v54 = vadd.f32 %v34, %v52
  %v55 = vadd.f32 %v35, %v52
  %v56 = vadd.f32 %v36, %v52
  %v57 = vadd.f32 %v37, %v52
  %v58 = vadd.f32 %v38, %v52
  %v59 = vadd.f32 %v39, %v52
  %v60 = vadd.f32 %v40, %v52
  %v61 = vadd.f32 %v41, %v52
  %v62 = vadd.f32 %v42, %v52
  %v63 = vadd.f32 %v43, %v52
  %v64 = vadd.f32 %v44, %v52
  %v65 = vadd.f32 %v45, %v52
  %v66 = vadd.f32 %v46, %v52
  %v67 = vadd.f32 %v47, %v52
  %v68 = vadd.f32 %v48, %v52
  %v69 = vadd.f32 %v49, %v52
  %v70 = vmax.f32 %v54, 0.0
  %v71 = vmax.f32 %v55, 0.0
  %v72 = vmax.f32 %v56, 0.0
  %v73 = vmax.f32 %v57, 0.0
  %v74 = vmax.f32 %v58, 0.0
  %v75 = vmax.f32 %v59, 0.0
  %v76 = vmax.f32 %v60, 0.0
  %v77 = vmax.f32 %v61, 0.0
  %v78 = vmax.f32 %v62, 0.0
  %v79 = vmax.f32 %v63, 0.0
  %v80 = vmax.f32 %v64, 0.0
  %v81 = vmax.f32 %v65, 0.0
  %v82 = vmax.f32 %v66, 0.0
  %v83 = vmax.f32 %v67, 0.0
  %v84 = vmax.f32 %v68, 0.0
  %v85 = vmax.f32 %v69, 0.0
  %86 = vst [vmem:[%s3] sm:$0xff] %v70
  %87 = vst [vmem:[%s3 + $0x8] sm:$0xff] %v71
  %88 = vst [vmem:[%s3 + $0x10] sm:$0xff] %v72
  %89 = vst [vmem:[%s3 + $0x18] sm:$0xff] %v73
  %90 = vst [vmem:[%s3 + $0x20] sm:$0xff] %v74
  %91 = vst [vmem:[%s3 + $0x28] sm:$0xff] %v75
  %92 = vst [vmem:[%s3 + $0x30] sm:$0xff] %v76
  %93 = vst [vmem:[%s3 + $0x38] sm:$0xff] %v77
  %94 = vst [vmem:[%s3 + $0x40] sm:$0xff] %v78
  %95 = vst [vmem:[%s3 + $0x48] sm:$0xff] %v79
  %96 = vst [vmem:[%s3 + $0x50] sm:$0xff] %v80
  %97 = vst [vmem:[%s3 + $0x58] sm:$0xff] %v81
  %98 = vst [vmem:[%s3 + $0x60] sm:$0xff] %v82
  %99 = vst [vmem:[%s3 + $0x68] sm:$0xff] %v83
  %100 = vst [vmem:[%s3 + $0x70] sm:$0xff] %v84
  %101 = vst [vmem:[%s3 + $0x78] sm:$0xff] %v85
  // Predicated region
  $region14: #{unet_down.3} parent=0 // pred_check
    _
  $region15: #{unet_down.3} parent=0 // pred_check_branch
    %103 = sbr.rel (0) target = $region17
  $region16: #{unet_down.3} parent=0 // pred_region
    _
  $region17: #{unet_down.3} parent=0 // pred_fallthru
    _
  // Predicated region
  $region18: #{unet_down.3} parent=0 // pred_check
    _
  $region19: #{unet_down.3} parent=0 // pred_check_branch
    %105 = sbr.rel (0) target = $region21
  $region20: #{unet_down.3} parent=0 // pred_region
    _
  $region21: #{unet_down.3} parent=0 // pred_fallthru
    _

// kernel: unet_down.2
$region0: #{unet_down.2}
  #allocation0 [shape = 'u32[]', space=smem, size = 0x4, offset = 0x4, fixed_abs, tag = 'smem constant byte address 0x4 - core index']
  #allocation1 [shape = 'u32[72,128]{1,0:T(1,128)}', space=vmem, size = 0x9000, scoped, tag = 'internal scratch']
  #allocation2 [shape = 'f32[128,128]{1,0:T(8,128)}', space=vmem, size = 0x10000, scoped, tag = 'scratch operand']
  %s0 = inlined_call_operand.vmem [shape: bf16[128,64], index: 0, kind: input, shape index: {}]
  %s1 = inlined_call_operand.vmem [shape: bf16[64,128], index: 1, kind: input, shape index: {}]
  %s2 = inlined_call_operand.vmem [shape: f32[128,128], index: 2, kind: output, shape index: {0}]
  %s3 = inlined_call_operand.vmem [shape: f32[8,128], index: 3, kind: output, shape index: {1}]
  %4 = xla_tuple %s2, %s3
  %s5 = sld [smem:[#allocation0]]
  $region34: #{unet_down.2} parent=0
    _
  %s7 = ssub.s32 1, %s5
  %s8 = scalar_select 0, %s7, %s5
  // Predicated region
  $region2: #{unet_down.2} parent=0 // pred_check
    _
  $region3: #{unet_down.2} parent=0 // pred_check_branch
    %10 = sbr.rel (0) target = $region5
  $region4: #{unet_down.2} parent=0 // pred_region
    _
  $region5: #{unet_down.2} parent=0 // pred_fallthru
    _
  // Predicated region
  $region6: #{unet_down.2} parent=0 // pred_check
    _
  $region7: #{unet_down.2} parent=0 // pred_check_branch
    %12 = sbr.rel (0) target = $region9
  $region8: #{unet_down.2} parent=0 // pred_region
    _
  $region9: #{unet_down.2} parent=0 // pred_fallthru
    _
  %p14 = scmp.eq.s32.totalorder 0, 0
  // Predicated region
  $region10: #{unet_down.2} parent=0 // pred_check
    %p15 = pneg %p14
  $region11: #{unet_down.2} parent=0 // pred_check_branch
    %17 = sbr.rel (%p15) target = $region13
  $region12: #{unet_down.2} parent=0 // pred_region
    %18 = vst [vmem:[#allocation2] sm:$0xff] 0.0
    %19 = vst [vmem:[#allocation2 + $0x8] sm:$0xff] 0.0
    %20 = vst [vmem:[#allocation2 + $0x10] sm:$0xff] 0.0
    %21 = vst [vmem:[#allocation2 + $0x18] sm:$0xff] 0.0
    %22 = vst [vmem:[#allocation2 + $0x20] sm:$0xff] 0.0
    %23 = vst [vmem:[#allocation2 + $0x28] sm:$0xff] 0.0
    %24 = vst [vmem:[#allocation2 + $0x30] sm:$0xff] 0.0
    %25 = vst [vmem:[#allocation2 + $0x38] sm:$0xff] 0.0
    %26 = vst [vmem:[#allocation2 + $0x40] sm:$0xff] 0.0
    %27 = vst [vmem:[#allocation2 + $0x48] sm:$0xff] 0.0
    %28 = vst [vmem:[#allocation2 + $0x50] sm:$0xff] 0.0
    %29 = vst [vmem:[#allocation2 + $0x58] sm:$0xff] 0.0
    %30 = vst [vmem:[#allocation2 + $0x60] sm:$0xff] 0.0
    %31 = vst [vmem:[#allocation2 + $0x68] sm:$0xff] 0.0
    %32 = vst [vmem:[#allocation2 + $0x70] sm:$0xff] 0.0
    %33 = vst [vmem:[#allocation2 + $0x78] sm:$0xff] 0.0
  $region13: #{unet_down.2} parent=0 // pred_fallthru
    _
  %v34 = vld [vmem:[#allocation2] sm:$0xff]
  %v35 = vld [vmem:[#allocation2 + $0x8] sm:$0xff]
  %v36 = vld [vmem:[#allocation2 + $0x10] sm:$0xff]
  %v37 = vld [vmem:[#allocation2 + $0x18] sm:$0xff]
  %v38 = vld [vmem:[#allocation2 + $0x20] sm:$0xff]
  %v39 = vld [vmem:[#allocation2 + $0x28] sm:$0xff]
  %v40 = vld [vmem:[#allocation2 + $0x30] sm:$0xff]
  %v41 = vld [vmem:[#allocation2 + $0x38] sm:$0xff]
  %v42 = vld [vmem:[#allocation2 + $0x40] sm:$0xff]
  %v43 = vld [vmem:[#allocation2 + $0x48] sm:$0xff]
  %v44 = vld [vmem:[#allocation2 + $0x50] sm:$0xff]
  %v45 = vld [vmem:[#allocation2 + $0x58] sm:$0xff]
  %v46 = vld [vmem:[#allocation2 + $0x60] sm:$0xff]
  %v47 = vld [vmem:[#allocation2 + $0x68] sm:$0xff]
  %v48 = vld [vmem:[#allocation2 + $0x70] sm:$0xff]
  %v49 = vld [vmem:[#allocation2 + $0x78] sm:$0xff]
  %v50 = vld [vmem:[%s0] sm:$0xf]
  %v51 = vld [vmem:[%s0 + $0x4] sm:$0xf]
  %v52 = vld [vmem:[%s0 + $0x8] sm:$0xf]
  %v53 = vld [vmem:[%s0 + $0xc] sm:$0xf]
  %v54 = vld [vmem:[%s0 + $0x10] sm:$0xf]
  %v55 = vld [vmem:[%s0 + $0x14] sm:$0xf]
  %v56 = vld [vmem:[%s0 + $0x18] sm:$0xf]
  %v57 = vld [vmem:[%s0 + $0x1c] sm:$0xf]
  %v58 = vld [vmem:[%s0 + $0x20] sm:$0xf]
  %v59 = vld [vmem:[%s0 + $0x24] sm:$0xf]
  %v60 = vld [vmem:[%s0 + $0x28] sm:$0xf]
  %v61 = vld [vmem:[%s0 + $0x2c] sm:$0xf]
  %v62 = vld [vmem:[%s0 + $0x30] sm:$0xf]
  %v63 = vld [vmem:[%s0 + $0x34] sm:$0xf]
  %v64 = vld [vmem:[%s0 + $0x38] sm:$0xf]
  %v65 = vld [vmem:[%s0 + $0x3c] sm:$0xf]
  %v66 = vld [vmem:[%s1] sm:$0xf]
  %v67 = vld [vmem:[%s1 + $0x4] sm:$0xf]
  %v68 = vld [vmem:[%s1 + $0x8] sm:$0xf]
  %v69 = vld [vmem:[%s1 + $0xc] sm:$0xf]
  %v70 = vld [vmem:[%s1 + $0x10] sm:$0xf]
  %v71 = vld [vmem:[%s1 + $0x14] sm:$0xf]
  %v72 = vld [vmem:[%s1 + $0x18] sm:$0xf]
  %v73 = vld [vmem:[%s1 + $0x1c] sm:$0xf]
  %v90 = vunpack.c.l.b16 %v50
  %v91 = vunpack.c.l.b16 %v51
  %v92 = vunpack.c.l.b16 %v52
  %v93 = vunpack.c.l.b16 %v53
  %v94 = vunpack.c.l.b16 %v54
  %v95 = vunpack.c.l.b16 %v55
  %v96 = vunpack.c.l.b16 %v56
  %v97 = vunpack.c.l.b16 %v57
  %v98 = vunpack.c.l.b16 %v58
  %v99 = vunpack.c.l.b16 %v59
  %v100 = vunpack.c.l.b16 %v60
  %v101 = vunpack.c.l.b16 %v61
  %v102 = vunpack.c.l.b16 %v62
  %v103 = vunpack.c.l.b16 %v63
  %v104 = vunpack.c.l.b16 %v64
  %v105 = vunpack.c.l.b16 %v65
  %v106 = vpack.c.b16 %v91, %v90
  %v107 = vpack.c.b16 %v93, %v92
  %v108 = vpack.c.b16 %v95, %v94
  %v109 = vpack.c.b16 %v97, %v96
  %v110 = vpack.c.b16 %v99, %v98
  %v111 = vpack.c.b16 %v101, %v100
  %v112 = vpack.c.b16 %v103, %v102
  %v113 = vpack.c.b16 %v105, %v104
  %v122 = vunpack.c.l.b16 %v66
  %v123 = vunpack.c.l.b16 %v67
  %v124 = vunpack.c.l.b16 %v68
  %v125 = vunpack.c.l.b16 %v69
  %v126 = vunpack.c.l.b16 %v70
  %v127 = vunpack.c.l.b16 %v71
  %v128 = vunpack.c.l.b16 %v72
  %v129 = vunpack.c.l.b16 %v73
  %v130 = vpack.c.b16 %v123, %v122
  %v131 = vpack.c.b16 %v125, %v124
  %v132 = vpack.c.b16 %v127, %v126
  %v133 = vpack.c.b16 %v129, %v128
  %vm138 = vcmask 523264
  %v140 = vsel %vm138, %v106, 0
  %v143 = vsel %vm138, %v107, 0
  %v146 = vsel %vm138, %v108, 0
  %v149 = vsel %vm138, %v109, 0
  %v152 = vsel %vm138, %v110, 0
  %v155 = vsel %vm138, %v111, 0
  %v158 = vsel %vm138, %v112, 0
  %v161 = vsel %vm138, %v113, 0
  %163 = vmatpush.bf16.msra.mxu0 0
  %164 = vmatpush.bf16.msra.mxu0 0
  %165 = vmatpush.bf16.msra.mxu0 0
  %166 = vmatpush.bf16.msra.mxu0 0
  %167 = vmatpush.bf16.msra.mxu0 %v133
  %168 = vmatpush.bf16.msra.mxu0 %v132
  %169 = vmatpush.bf16.msra.mxu0 %v131
  %170 = vmatpush.bf16.msra.mxu0 %v130
  %171 = vmatmul.bf16.gmra.mxu0 %v140
  %v172 = vpop.f32.mrf.mxu0
  %v173 = vadd.f32 0.0, %v172
  %v174 = vpop.f32.mrf.mxu0
  %v175 = vadd.f32 0.0, %v174
  %176 = vmatmul.bf16.gmra.mxu0 %v143
  %v177 = vpop.f32.mrf.mxu0
  %v178 = vadd.f32 0.0, %v177
  %v179 = vpop.f32.mrf.mxu0
  %v180 = vadd.f32 0.0, %v179
  %181 = vmatmul.bf16.gmra.mxu0 %v146
  %v182 = vpop.f32.mrf.mxu0
  %v183 = vadd.f32 0.0, %v182
  %v184 = vpop.f32.mrf.mxu0
  %v185 = vadd.f32 0.0, %v184
  %186 = vmatmul.bf16.gmra.mxu0 %v149
  %v187 = vpop.f32.mrf.mxu0
  %v188 = vadd.f32 0.0, %v187
  %v189 = vpop.f32.mrf.mxu0
  %v190 = vadd.f32 0.0, %v189
  %191 = vmatmul.bf16.gmra.mxu0 %v152
  %v192 = vpop.f32.mrf.mxu0
  %v193 = vadd.f32 0.0, %v192
  %v194 = vpop.f32.mrf.mxu0
  %v195 = vadd.f32 0.0, %v194
  %196 = vmatmul.bf16.gmra.mxu0 %v155
  %v197 = vpop.f32.mrf.mxu0
  %v198 = vadd.f32 0.0, %v197
  %v199 = vpop.f32.mrf.mxu0
  %v200 = vadd.f32 0.0, %v199
  %201 = vmatmul.bf16.gmra.mxu0 %v158
  %v202 = vpop.f32.mrf.mxu0
  %v203 = vadd.f32 0.0, %v202
  %v204 = vpop.f32.mrf.mxu0
  %v205 = vadd.f32 0.0, %v204
  %206 = vmatmul.bf16.gmra.mxu0 %v161
  %v207 = vpop.f32.mrf.mxu0
  %v208 = vadd.f32 0.0, %v207
  %v209 = vpop.f32.mrf.mxu0
  %v210 = vadd.f32 0.0, %v209
  %211 = vdwg.mxu0
  %v212 = vadd.f32 %v34, %v173
  %v213 = vadd.f32 %v35, %v175
  %v214 = vadd.f32 %v36, %v178
  %v215 = vadd.f32 %v37, %v180
  %v216 = vadd.f32 %v38, %v183
  %v217 = vadd.f32 %v39, %v185
  %v218 = vadd.f32 %v40, %v188
  %v219 = vadd.f32 %v41, %v190
  %v220 = vadd.f32 %v42, %v193
  %v221 = vadd.f32 %v43, %v195
  %v222 = vadd.f32 %v44, %v198
  %v223 = vadd.f32 %v45, %v200
  %v224 = vadd.f32 %v46, %v203
  %v225 = vadd.f32 %v47, %v205
  %v226 = vadd.f32 %v48, %v208
  %v227 = vadd.f32 %v49, %v210
  %228 = vst [vmem:[#allocation2] sm:$0xff] %v212
  %229 = vst [vmem:[#allocation2 + $0x8] sm:$0xff] %v213
  %230 = vst [vmem:[#allocation2 + $0x10] sm:$0xff] %v214
  %231 = vst [vmem:[#allocation2 + $0x18] sm:$0xff] %v215
  %232 = vst [vmem:[#allocation2 + $0x20] sm:$0xff] %v216
  %233 = vst [vmem:[#allocation2 + $0x28] sm:$0xff] %v217
  %234 = vst [vmem:[#allocation2 + $0x30] sm:$0xff] %v218
  %235 = vst [vmem:[#allocation2 + $0x38] sm:$0xff] %v219
  %236 = vst [vmem:[#allocation2 + $0x40] sm:$0xff] %v220
  %237 = vst [vmem:[#allocation2 + $0x48] sm:$0xff] %v221
  %238 = vst [vmem:[#allocation2 + $0x50] sm:$0xff] %v222
  %239 = vst [vmem:[#allocation2 + $0x58] sm:$0xff] %v223
  %240 = vst [vmem:[#allocation2 + $0x60] sm:$0xff] %v224
  %241 = vst [vmem:[#allocation2 + $0x68] sm:$0xff] %v225
  %242 = vst [vmem:[#allocation2 + $0x70] sm:$0xff] %v226
  %243 = vst [vmem:[#allocation2 + $0x78] sm:$0xff] %v227
  // Predicated region
  $region14: #{unet_down.2} parent=0 // pred_check
    %p244 = pneg %p14
  $region15: #{unet_down.2} parent=0 // pred_check_branch
    %246 = sbr.rel (%p244) target = $region17
  $region16: #{unet_down.2} parent=0 // pred_region
    %v247 = vld [vmem:[#allocation2] sm:$0xff]
    %v248 = vld [vmem:[#allocation2 + $0x8] sm:$0xff]
    %v249 = vld [vmem:[#allocation2 + $0x10] sm:$0xff]
    %v250 = vld [vmem:[#allocation2 + $0x18] sm:$0xff]
    %v251 = vld [vmem:[#allocation2 + $0x20] sm:$0xff]
    %v252 = vld [vmem:[#allocation2 + $0x28] sm:$0xff]
    %v253 = vld [vmem:[#allocation2 + $0x30] sm:$0xff]
    %v254 = vld [vmem:[#allocation2 + $0x38] sm:$0xff]
    %v255 = vld [vmem:[#allocation2 + $0x40] sm:$0xff]
    %v256 = vld [vmem:[#allocation2 + $0x48] sm:$0xff]
    %v257 = vld [vmem:[#allocation2 + $0x50] sm:$0xff]
    %v258 = vld [vmem:[#allocation2 + $0x58] sm:$0xff]
    %v259 = vld [vmem:[#allocation2 + $0x60] sm:$0xff]
    %v260 = vld [vmem:[#allocation2 + $0x68] sm:$0xff]
    %v261 = vld [vmem:[#allocation2 + $0x70] sm:$0xff]
    %v262 = vld [vmem:[#allocation2 + $0x78] sm:$0xff]
    %263 = vst [vmem:[%s2] sm:$0xff] %v247
    %264 = vst [vmem:[%s2 + $0x8] sm:$0xff] %v248
    %265 = vst [vmem:[%s2 + $0x10] sm:$0xff] %v249
    %266 = vst [vmem:[%s2 + $0x18] sm:$0xff] %v250
    %267 = vst [vmem:[%s2 + $0x20] sm:$0xff] %v251
    %268 = vst [vmem:[%s2 + $0x28] sm:$0xff] %v252
    %269 = vst [vmem:[%s2 + $0x30] sm:$0xff] %v253
    %270 = vst [vmem:[%s2 + $0x38] sm:$0xff] %v254
    %271 = vst [vmem:[%s2 + $0x40] sm:$0xff] %v255
    %272 = vst [vmem:[%s2 + $0x48] sm:$0xff] %v256
    %273 = vst [vmem:[%s2 + $0x50] sm:$0xff] %v257
    %274 = vst [vmem:[%s2 + $0x58] sm:$0xff] %v258
    %275 = vst [vmem:[%s2 + $0x60] sm:$0xff] %v259
    %276 = vst [vmem:[%s2 + $0x68] sm:$0xff] %v260
    %277 = vst [vmem:[%s2 + $0x70] sm:$0xff] %v261
    %278 = vst [vmem:[%s2 + $0x78] sm:$0xff] %v262
    %279 = vst [vmem:[%s3] sm:$0xff] 0.0
    %v280 = vadd.f32 %v247, %v248
    %v281 = vadd.f32 %v280, %v249
    %v282 = vadd.f32 %v281, %v250
    %v283 = vadd.f32 %v282, %v251
    %v284 = vadd.f32 %v283, %v252
    %v285 = vadd.f32 %v284, %v253
    %v286 = vadd.f32 %v285, %v254
    %v287 = vadd.f32 %v286, %v255
    %v288 = vadd.f32 %v287, %v256
    %v289 = vadd.f32 %v288, %v257
    %v290 = vadd.f32 %v289, %v258
    %v291 = vadd.f32 %v290, %v259
    %v292 = vadd.f32 %v291, %v260
    %v293 = vadd.f32 %v292, %v261
    %v294 = vadd.f32 %v293, %v262
    %v295 = vrot.slane %v294, 4
    %v296 = vadd.f32 %v294, %v295
    %v297 = vrot.slane %v296, 2
    %v298 = vadd.f32 %v296, %v297
    %v299 = vrot.slane %v298, 1
    %v300 = vadd.f32 %v298, %v299
    %301 = vst [vmem:[%s3] sm:$0x1] %v300
    %v302 = vmul.f32 %v247, %v247
    %v303 = vmul.f32 %v248, %v248
    %v304 = vmul.f32 %v249, %v249
    %v305 = vmul.f32 %v250, %v250
    %v306 = vmul.f32 %v251, %v251
    %v307 = vmul.f32 %v252, %v252
    %v308 = vmul.f32 %v253, %v253
    %v309 = vmul.f32 %v254, %v254
    %v310 = vmul.f32 %v255, %v255
    %v311 = vmul.f32 %v256, %v256
    %v312 = vmul.f32 %v257, %v257
    %v313 = vmul.f32 %v258, %v258
    %v314 = vmul.f32 %v259, %v259
    %v315 = vmul.f32 %v260, %v260
    %v316 = vmul.f32 %v261, %v261
    %v317 = vmul.f32 %v262, %v262
    %v318 = vadd.f32 %v302, %v303
    %v319 = vadd.f32 %v318, %v304
    %v320 = vadd.f32 %v319, %v305
    %v321 = vadd.f32 %v320, %v306
    %v322 = vadd.f32 %v321, %v307
    %v323 = vadd.f32 %v322, %v308
    %v324 = vadd.f32 %v323, %v309
    %v325 = vadd.f32 %v324, %v310
    %v326 = vadd.f32 %v325, %v311
    %v327 = vadd.f32 %v326, %v312
    %v328 = vadd.f32 %v327, %v313
    %v329 = vadd.f32 %v328, %v314
    %v330 = vadd.f32 %v329, %v315
    %v331 = vadd.f32 %v330, %v316
    %v332 = vadd.f32 %v331, %v317
    %v333 = vrot.slane %v332, 4
    %v334 = vadd.f32 %v332, %v333
    %v335 = vrot.slane %v334, 2
    %v336 = vadd.f32 %v334, %v335
    %v337 = vrot.slane %v336, 1
    %v338 = vadd.f32 %v336, %v337
    %339 = vst [vmem:[%s3 + $0x1] sm:$0x1] %v338
  $region17: #{unet_down.2} parent=0 // pred_fallthru
    _
  // Predicated region
  $region18: #{unet_down.2} parent=0 // pred_check
    _
  $region19: #{unet_down.2} parent=0 // pred_check_branch
    %341 = sbr.rel (0) target = $region21
  $region20: #{unet_down.2} parent=0 // pred_region
    _
  $region21: #{unet_down.2} parent=0 // pred_fallthru
    _
  // Predicated region
  $region22: #{unet_down.2} parent=0 // pred_check
    _
  $region23: #{unet_down.2} parent=0 // pred_check_branch
    %343 = sbr.rel (0) target = $region25
  $region24: #{unet_down.2} parent=0 // pred_region
    _
  $region25: #{unet_down.2} parent=0 // pred_fallthru
    _
  // Predicated region
  $region26: #{unet_down.2} parent=0 // pred_check
    _
  $region27: #{unet_down.2} parent=0 // pred_check_branch
    %345 = sbr.rel (0) target = $region29
  $region28: #{unet_down.2} parent=0 // pred_region
    _
  $region29: #{unet_down.2} parent=0 // pred_fallthru
    _
  // Predicated region
  $region30: #{unet_down.2} parent=0 // pred_check
    _
  $region31: #{unet_down.2} parent=0 // pred_check_branch
    %347 = sbr.rel (0) target = $region33
  $region32: #{unet_down.2} parent=0 // pred_region
    _
  $region33: #{unet_down.2} parent=0 // pred_fallthru
    _

</llo_original>
